<compile_context>
chip_gen: v6e
topology: v6e:2x2x1
jax: 0.10.0
libtpu: 0.0.40
codegen_flags: <defaults>
</compile_context>

<pallas_src>
import functools

import jax
import jax.numpy as jnp
from jax import lax
from jax.experimental import pallas as pl
from jax.experimental.pallas import tpu as pltpu


def _round_up(x, m):
    return ((x + m - 1) // m) * m


def _vmem_budget_bytes():
    """Per-generation scoped-VMEM budget (~65% of physical, rest for compiler scratch)."""
    cap = 64 * 1024 * 1024  # conservative fallback: v7x per-core VMEM
    try:
        info = pltpu.get_tpu_info()
        cap = int(getattr(info, "vmem_capacity_bytes", cap))
    except Exception:
        pass
    return int(cap * 0.65)


def _pick_tv(voc, emb_p, topic_p, budget, block_voc):
    """Choose the voc tile: big on v5e/v6e, bounded on v7x, MXU/sublane friendly."""
    if block_voc is None:
        block_voc = 2048 if budget >= 72 * 1024 * 1024 else 1024
    tv = min(block_voc, _round_up(voc, 256))
    tv = max(16, _round_up(tv, 16))
    td_max = 512  # upper bound used for the pass-2 VMEM estimate

    def fits(tv_):
        p1 = (2 * tv_ * emb_p * 2            # rho blocks (bf16, double-buffered)
              + 2 * topic_p * emb_p * 2      # alphas (resident)
              + 2 * tv_ * topic_p * 2        # e-cache out blocks
              + 4 * 8 * topic_p * 4)         # per-tile max / sum-exp outs
        p2 = (2 * tv_ * topic_p * 2          # e-cache in blocks
              + 2 * topic_p * td_max * 2     # x blocks
              + 2 * tv_ * td_max * 4         # f32 out blocks
              + tv_ * topic_p * 2            # scaled-e scratch
              + 2 * 8 * topic_p * 4)         # per-tile scale
        return max(p1, p2) <= budget

    while not fits(tv) and tv > 256:
        tv = max(256, _round_up(tv // 2, 16))
    return tv


def _pick_td(d_p, block_d):
    """Lane-dense D tile that divides the padded D (d_p is a multiple of 128)."""
    if block_d is not None:
        td = min(_round_up(block_d, 128), d_p)
        while d_p % td:
            td -= 128
        return td
    for cand in (512, 256, 128):
        if cand <= d_p and d_p % cand == 0:
            return cand
    return d_p


def prepare_params(rho, alphas, *, block_voc=None):
    """Pad + cast the parameters once.

    Hoist this out of the per-step path when rho/alphas are module parameters
    (perf item: the bf16 cast/pad is otherwise a separate XLA copy every call).
    """
    voc, emb = rho.shape
    topic, emb2 = alphas.shape
    assert emb2 == emb
    budget = _vmem_budget_bytes()
    emb_p = _round_up(emb, 128)
    topic_p = _round_up(topic, 128)
    tv = _pick_tv(voc, emb_p, topic_p, budget, block_voc)
    voc_p = _round_up(voc, tv)
    rho_p = jnp.pad(rho.astype(jnp.bfloat16),
                    ((0, voc_p - voc), (0, emb_p - emb)))
    alphas_p = jnp.pad(alphas.astype(jnp.bfloat16),
                       ((0, topic_p - topic), (0, emb_p - emb)))
    return {"rho_p": rho_p, "alphas_p": alphas_p,
            "voc": voc, "emb": emb, "topic": topic,
            "voc_p": voc_p, "emb_p": emb_p, "topic_p": topic_p,
            "tv": tv, "budget": budget}


def _stats_kernel(rho_ref, alphas_ref, e_ref, m_ref, s_ref, *, voc_size, block_voc):
    """Per-voc-tile softmax partials: e = exp(logits - m_tile), m_tile, sum(e).

    Fully parallel over voc tiles (no loop-carried state) -> megacore-friendly.
    """
    i = pl.program_id(0)

    # logits tile = rho_tile @ alphas.T, contracting emb directly (no explicit .T).
    logits = lax.dot_general(
        rho_ref[...], alphas_ref[...],
        dimension_numbers=(((1,), (1,)), ((), ())),
        preferred_element_type=jnp.float32,
    )  # (tv, topic_p) f32

    # Mask zero-padded voc rows so they do not contribute (exp(-inf) == 0).
    row = i * block_voc + lax.broadcasted_iota(jnp.int32, logits.shape, 0)
    logits = jnp.where(row < voc_size, logits, -jnp.inf)

    m_tile = jnp.max(logits, axis=0, keepdims=True)       # (1, topic_p), finite
    e = jnp.exp(logits - m_tile)                           # padded rows -> 0
    e_ref[...] = e.astype(e_ref.dtype)                     # bf16 cache for pass 2
    m_ref[...] = m_tile[None]                              # (1, 1, topic_p)
    s_ref[...] = jnp.sum(e, axis=0, keepdims=True)[None]   # (1, 1, topic_p)


def _apply_kernel(e_ref, scale_ref, x_ref, o_ref, es_ref):
    """out(i,j) = (e_tile(i) * scale(i)) @ x_tile(j), with the rescale cached per voc tile."""
    @pl.when(pl.program_id(1) == 0)
    def _():
        # scale = exp(m_tile - m_glob) / sum_exp_glob, broadcast over the tile rows.
        es_ref[...] = (e_ref[...].astype(jnp.float32) * scale_ref[0]).astype(es_ref.dtype)

    o_ref[...] = jnp.dot(
        es_ref[...], x_ref[...], preferred_element_type=jnp.float32
    ).astype(o_ref.dtype)


def conv1d_softmax_etm(rho, alphas, x, t=0, *, block_voc=None, block_d=None,
                       out_dtype=jnp.float32, prepared=None):
    """Forward of Conv1DSoftmaxEtm.

    rho:    (voc_size, emb_size)
    alphas: (topic_size, emb_size)
    x:      any shape whose view(-1, last) is (topic_size, D)
    t:      only affects autograd (rho.detach()) in the original module; the
            forward values are identical, so it is ignored here.
    prepared: output of prepare_params() to hoist the parameter pad/cast.
    """
    del t  # forward-only: detach() does not change forward values
    if prepared is None:
        prepared = prepare_params(rho, alphas, block_voc=block_voc)
    p = prepared
    voc, topic = p["voc"], p["topic"]
    voc_p, topic_p, emb_p = p["voc_p"], p["topic_p"], p["emb_p"]
    tv, budget = p["tv"], p["budget"]
    n_tiles = voc_p // tv

    x2d = x.reshape(-1, x.shape[-1])  # == x.view(-1, x.size(-1))
    assert x2d.shape[0] == topic, "x must view to (topic_size, D)"
    D = x2d.shape[1]
    d_p = _round_up(D, 128)
    td = _pick_td(d_p, block_d)
    n_d = d_p // td

    x_p = jnp.pad(x2d.astype(jnp.bfloat16),
                  ((0, topic_p - topic), (0, d_p - D)))

    # ---- Pass 1 (parallel over voc tiles): per-tile exp cache + (max, sum-exp).
    e_cache, m_parts, s_parts = pl.pallas_call(
        functools.partial(_stats_kernel, voc_size=voc, block_voc=tv),
        out_shape=(
            jax.ShapeDtypeStruct((voc_p, topic_p), jnp.bfloat16),
            jax.ShapeDtypeStruct((n_tiles, 1, topic_p), jnp.float32),
            jax.ShapeDtypeStruct((n_tiles, 1, topic_p), jnp.float32),
        ),
        grid_spec=pltpu.PrefetchScalarGridSpec(
            num_scalar_prefetch=0,
            grid=(n_tiles,),
            in_specs=[
                pl.BlockSpec((tv, emb_p), lambda i: (i, 0)),       # rho tile
                pl.BlockSpec((topic_p, emb_p), lambda i: (0, 0)),  # alphas (resident)
            ],
            out_specs=(
                pl.BlockSpec((tv, topic_p), lambda i: (i, 0)),       # e-cache
                pl.BlockSpec((1, 1, topic_p), lambda i: (i, 0, 0)),  # per-tile max
                pl.BlockSpec((1, 1, topic_p), lambda i: (i, 0, 0)),  # per-tile sum-exp
            ),
        ),
        compiler_params=pltpu.CompilerParams(
            dimension_semantics=("parallel",),   # independent voc tiles (megacore)
            vmem_limit_bytes=budget,
        ),
    )(p["rho_p"], p["alphas_p"])

    # ---- Tiny combine in plain JAX: global max / logsumexp + per-tile rescale.
    m_glob = jnp.max(m_parts, axis=0)                                  # (1, topic_p)
    s_glob = jnp.sum(s_parts * jnp.exp(m_parts - m_glob), axis=0)      # (1, topic_p)
    scale = (jnp.exp(m_parts - m_glob) / s_glob).astype(jnp.float32)   # (n_tiles, 1, topic_p)

    # ---- Pass 2 (parallel over voc tiles, D tiled innermost):
    #      out_tile = (e_cache_tile * scale_tile) @ x_tile.
    out_p = pl.pallas_call(
        _apply_kernel,
        out_shape=jax.ShapeDtypeStruct((voc_p, d_p), out_dtype),
        grid_spec=pltpu.PrefetchScalarGridSpec(
            num_scalar_prefetch=0,
            grid=(n_tiles, n_d),
            in_specs=[
                pl.BlockSpec((tv, topic_p), lambda i, j: (i, 0)),       # e-cache tile
                pl.BlockSpec((1, 1, topic_p), lambda i, j: (i, 0, 0)),  # per-tile scale
                pl.BlockSpec((topic_p, td), lambda i, j: (0, j)),       # x tile
            ],
            out_specs=pl.BlockSpec((tv, td), lambda i, j: (i, j)),
            scratch_shapes=[pltpu.VMEM((tv, topic_p), jnp.bfloat16)],   # scaled-e cache
        ),
        compiler_params=pltpu.CompilerParams(
            # voc tiles independent -> parallel; D axis carries the scaled-e
            # scratch for a given voc tile -> keep it on one core ("arbitrary").
            dimension_semantics=("parallel", "arbitrary"),
            vmem_limit_bytes=budget,
        ),
    )(e_cache, scale, x_p)

    return out_p[:voc, :D]


def _reference(rho, alphas, x):
    logits = rho @ alphas.T
    w = jax.nn.softmax(logits, axis=0)
    return w @ x.reshape(-1, x.shape[-1])


if __name__ == "__main__":
    # Small shapes consistent with the module; deliberately non-multiples of
    # 8/128 to exercise padding + voc masking, with block_voc=128 / block_d=128
    # to exercise the multi-tile parallel pass 1, the JAX combine, and the
    # D-tiled pass 2 (scaled-e scratch reused across D tiles).
    voc_size, topic_size, emb_size, D = 300, 16, 32, 200

    key = jax.random.PRNGKey(0)
    k_rho, k_alpha, k_x = jax.random.split(key, 3)

    # nn.init.normal_(w, std=0.02) equivalents
    rho = 0.02 * jax.random.normal(k_rho, (voc_size, emb_size), dtype=jnp.float32)
    alphas = 0.02 * jax.random.normal(k_alpha, (topic_size, emb_size),
                                      dtype=jnp.float32)
    # x views to (topic_size, D) inside forward, like torch's x.view(-1, x.size(-1)).
    x = jax.random.normal(k_x, (4, 4, D), dtype=jnp.float32)

    ref = _reference(rho, alphas, x)

    # (a) Hoisted-parameter path with small tiles (multi-tile voc + multi-tile D).
    prepared = prepare_params(rho, alphas, block_voc=128)
    out = conv1d_softmax_etm(rho, alphas, x, t=0, block_d=128, prepared=prepared)
    out = jax.block_until_ready(out)
    assert out.shape == (voc_size, D)
    assert jnp.allclose(out, ref, atol=3e-3, rtol=2e-2), "mismatch vs reference (tiled)"

    # (b) Default auto-sized path (per-generation VMEM budget / tile sizes).
    out2 = conv1d_softmax_etm(rho, alphas, x, t=1)
    out2 = jax.block_until_ready(out2)
    assert out2.shape == (voc_size, D)
    assert jnp.allclose(out2, ref, atol=3e-3, rtol=2e-2), "mismatch vs reference (default)"

    print("KERNEL_OK")
</pallas_src>

<mosaic_0001>
module attributes {stable_mosaic.version = 11 : i64} {
  func.func @_stats_kernel(%arg0: i32, %arg1: memref<128x128xbf16, #tpu.memory_space<vmem>>, %arg2: memref<128x128xbf16, #tpu.memory_space<vmem>>, %arg3: memref<128x128xbf16, #tpu.memory_space<vmem>>, %arg4: memref<1x1x128xf32, #tpu.memory_space<vmem>>, %arg5: memref<1x1x128xf32, #tpu.memory_space<vmem>>) attributes {dimension_semantics = [#tpu.dimension_semantics<parallel>], iteration_bounds = array<i64: 3>, scalar_prefetch = 0 : i64, scratch_operands = 0 : i64, tpu.core_type = #tpu.core_type<tc>, window_params = [{transform_indices = @transform_0, window_bounds = array<i64: 128, 128>}, {pipeline_mode = #tpu.pipeline_mode<synchronous>, transform_indices = @transform_1, window_bounds = array<i64: 128, 128>}, {transform_indices = @transform_2, window_bounds = array<i64: 128, 128>}, {transform_indices = @transform_3, window_bounds = array<i64: 1, 1, 128>}, {transform_indices = @transform_4, window_bounds = array<i64: 1, 1, 128>}]} {
    %c0 = arith.constant 0 : index
    %c0_0 = arith.constant 0 : index
    %0 = vector.load %arg1[%c0, %c0_0] : memref<128x128xbf16, #tpu.memory_space<vmem>>, vector<128x128xbf16>
    %c0_1 = arith.constant 0 : index
    %c0_2 = arith.constant 0 : index
    %1 = vector.load %arg2[%c0_1, %c0_2] : memref<128x128xbf16, #tpu.memory_space<vmem>>, vector<128x128xbf16>
    %cst = arith.constant dense<0.000000e+00> : vector<128x128xf32>
    %2 = tpu.matmul %0, %1, %cst {dimension_numbers = #tpu.dot_dimension_numbers<[1], [1], [0], [0], [0, 0, 1, 0], [], []>} : vector<128x128xbf16>, vector<128x128xbf16>, vector<128x128xf32> -> vector<128x128xf32>
    %c128_i32 = arith.constant 128 : i32
    %3 = arith.muli %arg0, %c128_i32 : i32
    %4 = tpu.iota {dimensions = array<i32: 0>} : vector<128x128xi32>
    %5 = vector.broadcast %3 : i32 to vector<128x128xi32>
    %6 = arith.addi %5, %4 : vector<128x128xi32>
    %c300_i32 = arith.constant 300 : i32
    %7 = vector.broadcast %c300_i32 : i32 to vector<128x128xi32>
    %8 = arith.cmpi slt, %6, %7 : vector<128x128xi32>
    %cst_3 = arith.constant 0xFF800000 : f32
    %9 = vector.broadcast %cst_3 : f32 to vector<128x128xf32>
    %10 = arith.select %8, %2, %9 : vector<128x128xi1>, vector<128x128xf32>
    %cst_4 = arith.constant dense<0xFF800000> : vector<128xf32>
    %11 = vector.multi_reduction <maximumf>, %10, %cst_4 [0] : vector<128x128xf32> to vector<128xf32>
    %12 = vector.shape_cast %11 : vector<128xf32> to vector<1x128xf32>
    %13 = vector.broadcast %12 : vector<1x128xf32> to vector<128x128xf32>
    %14 = arith.subf %10, %13 : vector<128x128xf32>
    %15 = math.exp %14 : vector<128x128xf32>
    %16 = arith.truncf %15 : vector<128x128xf32> to vector<128x128xbf16>
    %c0_5 = arith.constant 0 : index
    %c0_6 = arith.constant 0 : index
    %17 = vector.load %arg3[%c0_5, %c0_6] : memref<128x128xbf16, #tpu.memory_space<vmem>>, vector<128x128xbf16>
    tpu.vector_store %arg3[%c0_5, %c0_6], %16 {strides = array<i32>} : memref<128x128xbf16, #tpu.memory_space<vmem>>, vector<128x128xbf16>,
    %18 = vector.shape_cast %12 : vector<1x128xf32> to vector<1x1x128xf32>
    %c0_7 = arith.constant 0 : index
    %c0_8 = arith.constant 0 : index
    %c0_9 = arith.constant 0 : index
    %19 = vector.load %arg4[%c0_7, %c0_8, %c0_9] : memref<1x1x128xf32, #tpu.memory_space<vmem>>, vector<1x1x128xf32>
    tpu.vector_store %arg4[%c0_7, %c0_8, %c0_9], %18 {strides = array<i32>} : memref<1x1x128xf32, #tpu.memory_space<vmem>>, vector<1x1x128xf32>,
    %cst_10 = arith.constant dense<0.000000e+00> : vector<128xf32>
    %20 = vector.multi_reduction <add>, %15, %cst_10 [0] : vector<128x128xf32> to vector<128xf32>
    %21 = vector.shape_cast %20 : vector<128xf32> to vector<1x128xf32>
    %22 = vector.shape_cast %21 : vector<1x128xf32> to vector<1x1x128xf32>
    %c0_11 = arith.constant 0 : index
    %c0_12 = arith.constant 0 : index
    %c0_13 = arith.constant 0 : index
    %23 = vector.load %arg5[%c0_11, %c0_12, %c0_13] : memref<1x1x128xf32, #tpu.memory_space<vmem>>, vector<1x1x128xf32>
    tpu.vector_store %arg5[%c0_11, %c0_12, %c0_13], %22 {strides = array<i32>} : memref<1x1x128xf32, #tpu.memory_space<vmem>>, vector<1x1x128xf32>,
    return
  }
  func.func @transform_0(%arg0: i32) -> (i32, i32) {
    %c0_i32 = arith.constant 0 : i32
    %c0_i32_0 = arith.constant 0 : i32
    return %arg0, %c0_i32 : i32, i32
  }
  func.func @transform_1(%arg0: i32) -> (i32, i32) {
    %c0_i32 = arith.constant 0 : i32
    %c0_i32_0 = arith.constant 0 : i32
    %c0_i32_1 = arith.constant 0 : i32
    return %c0_i32, %c0_i32_0 : i32, i32
  }
  func.func @transform_2(%arg0: i32) -> (i32, i32) {
    %c0_i32 = arith.constant 0 : i32
    %c0_i32_0 = arith.constant 0 : i32
    return %arg0, %c0_i32 : i32, i32
  }
  func.func @transform_3(%arg0: i32) -> (i32, i32, i32) {
    %c0_i32 = arith.constant 0 : i32
    %c0_i32_0 = arith.constant 0 : i32
    %c0_i32_1 = arith.constant 0 : i32
    return %arg0, %c0_i32, %c0_i32_0 : i32, i32, i32
  }
  func.func @transform_4(%arg0: i32) -> (i32, i32, i32) {
    %c0_i32 = arith.constant 0 : i32
    %c0_i32_0 = arith.constant 0 : i32
    %c0_i32_1 = arith.constant 0 : i32
    return %arg0, %c0_i32, %c0_i32_0 : i32, i32, i32
  }
}

</mosaic_0001>

<llo_original>
// kernel: tpu_custom_call.1
$region0: #{tpu_custom_call.1}
  #allocation0 [shape = 'u32[]', space=smem, size = 0x4, offset = 0x4, fixed_abs, tag = 'smem constant byte address 0x4 - core index']
  #allocation1 [shape = 'u32[144,128]{1,0:T(1,128)}', space=vmem, size = 0x12000, scoped, tag = 'internal scratch']
  %s0 = inlined_call_operand.hbm [shape: bf16[384,128], index: 0, kind: input, shape index: {}]
  %s1 = inlined_call_operand.hbm [shape: bf16[128,128], index: 1, kind: input, shape index: {}]
  %s2 = inlined_call_operand.hbm [shape: bf16[384,128], index: 2, kind: output, shape index: {0}]
  %s3 = inlined_call_operand.hbm [shape: f32[3,1,128], index: 3, kind: output, shape index: {1}]
  %s4 = inlined_call_operand.hbm [shape: f32[3,1,128], index: 4, kind: output, shape index: {2}]
  %5 = xla_tuple %s2, %s3, %s4
  %s6 = sld [smem:[#allocation0]]
  $region65: #{tpu_custom_call.1} parent=0
    _
  %s8 = ssub.s32 1, %s6
  %s9 = scalar_select 0, %s8, %s6
  $region1: #{tpu_custom_call.1} parent=0
    #allocation2 [shape = 'u8[65536]{0}', space=vmem, size = 0x10000, scoped, tag = 'input window, operand 0']
    #allocation3 [shape = 's32[2]{0}', space=sflag, size = 0x8, scoped, tag = 'scoped memory for tpu_custom_call.1']
    #allocation4 [shape = 's32[2]{0}', space=sflag, size = 0x8, scoped, tag = 'scoped memory for tpu_custom_call.1']
    #allocation5 [shape = 'u8[32768]{0}', space=vmem, size = 0x8000, scoped, tag = 'input window, operand 1, single buffered']
    #allocation6 [shape = 's32[1]{0}', space=sflag, size = 0x4, scoped, tag = 'scoped memory for tpu_custom_call.1']
    #allocation7 [shape = 'u8[65536]{0}', space=vmem, size = 0x10000, scoped, tag = 'output window, operand 0']
    #allocation8 [shape = 'u8[1024]{0}', space=vmem, size = 0x400, scoped, tag = 'output window, operand 1']
    #allocation9 [shape = 's32[2]{0}', space=sflag, size = 0x8, scoped, tag = 'scoped memory for tpu_custom_call.1']
    #allocation10 [shape = 'u8[1024]{0}', space=vmem, size = 0x400, scoped, tag = 'output window, operand 2']
    %10 = vsyncpa [#allocation3], 0
    %s11 = scalar_lea.sflag [#allocation3], 1
    %12 = vsyncpa %s11, 0
    %13 = vsyncpa [#allocation6], 0
    %14 = vsyncpa [#allocation4], 0
    %s15 = scalar_lea.sflag [#allocation4], 1
    %16 = vsyncpa %s15, 0
    %17 = vsyncpa [#allocation9], 0
    %s18 = scalar_lea.sflag [#allocation9], 1
    %19 = vsyncpa %s18, 0
    loop: start=0, step=1, limit=5
    $region2: #{tpu_custom_call.1} parent=1 // loop_pre_header
      _
    $region3: #{tpu_custom_call.1} parent=1 // loop_header
      %s21 = sphi 0, %s25
      %p22 = scmp.ge.s32.totalorder %s21, 5
      %s31 = sphi 0, %s33
      %s34 = sphi 0, %s31
      %s35 = sphi 0, %s34
      %s51 = sphi 0, %s35
      %s55 = sphi 0, %s55
      %s57 = sphi 0, %s55
      %s58 = sphi 0, %s57
      %s72 = sphi 0, %s58
      %s78 = sphi 0, %s80
      %s81 = sphi 0, %s78
      %s82 = sphi 0, %s81
      %s98 = sphi 0, %s82
      %s104 = sphi 0, %s106
      %s107 = sphi 0, %s104
      %s108 = sphi 0, %s107
      %s124 = sphi 0, %s108
      %s130 = sphi 0, %s132
      %s133 = sphi 0, %s130
      %s134 = sphi 0, %s133
      %s150 = sphi 0, %s134
    $region4: #{tpu_custom_call.1} parent=1 // loop_header_branch
      %24 = sbr.rel (%p22) target = $region8
    $region5: #{tpu_custom_call.1} parent=1 // loop_body
      %s26 = ssub.s32 %s21, 1
      %s27 = ssub.s32 %s21, 2
      %s28 = sadd.s32 %s21, 1
      %s29 = ssub.s32 %s21, %s28
      %p30 = scmp.eq.s32.totalorder %s29, 0
      %s32 = sadd.s32 %s31, 1
      %s33 = scalar_select %p30, %s31, %s32
      %p36 = pneg %p30
      %p37 = scmp.eq.s32.totalorder %s21, 2
      %p38 = por %p36, %p37
      %p39 = scmp.ne.s32.totalorder %s31, %s34
      %p40 = scmp.eq.s32.totalorder %s21, 0
      %p41 = por %p39, %p40
      %p42 = scmp.ne.s32.totalorder %s31, %s34
      %p43 = scmp.eq.s32.totalorder %s26, 2
      %p44 = por %p42, %p43
      %p45 = scmp.ne.s32.totalorder %s34, %s35
      %p46 = scmp.eq.s32.totalorder %s26, 0
      %p47 = por %p45, %p46
      %p48 = scmp.ne.s32.totalorder %s34, %s35
      %p49 = scmp.eq.s32.totalorder %s27, 2
      %p50 = por %p48, %p49
      %p52 = scmp.ne.s32.totalorder %s35, %s51
      %p53 = scmp.eq.s32.totalorder %s27, 0
      %p54 = por %p52, %p53
      %s56 = sadd.s32 %s55, 1
      %p59 = scmp.eq.s32.totalorder %s21, 2
      %p60 = scmp.ne.s32.totalorder %s55, %s57
      %p61 = scmp.eq.s32.totalorder %s21, 0
      %p62 = por %p60, %p61
      %p63 = scmp.ne.s32.totalorder %s55, %s57
      %p64 = scmp.eq.s32.totalorder %s26, 2
      %p65 = por %p63, %p64
      %p66 = scmp.ne.s32.totalorder %s57, %s58
      %p67 = scmp.eq.s32.totalorder %s26, 0
      %p68 = por %p66, %p67
      %p69 = scmp.ne.s32.totalorder %s57, %s58
      %p70 = scmp.eq.s32.totalorder %s27, 2
      %p71 = por %p69, %p70
      %p73 = scmp.ne.s32.totalorder %s58, %s72
      %p74 = scmp.eq.s32.totalorder %s27, 0
      %p75 = por %p73, %p74
      %s76 = ssub.s32 %s21, %s28
      %p77 = scmp.eq.s32.totalorder %s76, 0
      %s79 = sadd.s32 %s78, 1
      %s80 = scalar_select %p77, %s78, %s79
      %p83 = pneg %p77
      %p84 = scmp.eq.s32.totalorder %s21, 2
      %p85 = por %p83, %p84
      %p86 = scmp.ne.s32.totalorder %s78, %s81
      %p87 = scmp.eq.s32.totalorder %s21, 0
      %p88 = por %p86, %p87
      %p89 = scmp.ne.s32.totalorder %s78, %s81
      %p90 = scmp.eq.s32.totalorder %s26, 2
      %p91 = por %p89, %p90
      %p92 = scmp.ne.s32.totalorder %s81, %s82
      %p93 = scmp.eq.s32.totalorder %s26, 0
      %p94 = por %p92, %p93
      %p95 = scmp.ne.s32.totalorder %s81, %s82
      %p96 = scmp.eq.s32.totalorder %s27, 2
      %p97 = por %p95, %p96
      %p99 = scmp.ne.s32.totalorder %s82, %s98
      %p100 = scmp.eq.s32.totalorder %s27, 0
      %p101 = por %p99, %p100
      %s102 = ssub.s32 %s21, %s28
      %p103 = scmp.eq.s32.totalorder %s102, 0
      %s105 = sadd.s32 %s104, 1
      %s106 = scalar_select %p103, %s104, %s105
      %p109 = pneg %p103
      %p110 = scmp.eq.s32.totalorder %s21, 2
      %p111 = por %p109, %p110
      %p112 = scmp.ne.s32.totalorder %s104, %s107
      %p113 = scmp.eq.s32.totalorder %s21, 0
      %p114 = por %p112, %p113
      %p115 = scmp.ne.s32.totalorder %s104, %s107
      %p116 = scmp.eq.s32.totalorder %s26, 2
      %p117 = por %p115, %p116
      %p118 = scmp.ne.s32.totalorder %s107, %s108
      %p119 = scmp.eq.s32.totalorder %s26, 0
      %p120 = por %p118, %p119
      %p121 = scmp.ne.s32.totalorder %s107, %s108
      %p122 = scmp.eq.s32.totalorder %s27, 2
      %p123 = por %p121, %p122
      %p125 = scmp.ne.s32.totalorder %s108, %s124
      %p126 = scmp.eq.s32.totalorder %s27, 0
      %p127 = por %p125, %p126
      %s128 = ssub.s32 %s21, %s28
      %p129 = scmp.eq.s32.totalorder %s128, 0
      %s131 = sadd.s32 %s130, 1
      %s132 = scalar_select %p129, %s130, %s131
      %p135 = pneg %p129
      %p136 = scmp.eq.s32.totalorder %s21, 2
      %p137 = por %p135, %p136
      %p138 = scmp.ne.s32.totalorder %s130, %s133
      %p139 = scmp.eq.s32.totalorder %s21, 0
      %p140 = por %p138, %p139
      %p141 = scmp.ne.s32.totalorder %s130, %s133
      %p142 = scmp.eq.s32.totalorder %s26, 2
      %p143 = por %p141, %p142
      %p144 = scmp.ne.s32.totalorder %s133, %s134
      %p145 = scmp.eq.s32.totalorder %s26, 0
      %p146 = por %p144, %p145
      %p147 = scmp.ne.s32.totalorder %s133, %s134
      %p148 = scmp.eq.s32.totalorder %s27, 2
      %p149 = por %p147, %p148
      %p151 = scmp.ne.s32.totalorder %s134, %s150
      %p152 = scmp.eq.s32.totalorder %s27, 0
      %p153 = por %p151, %p152
      %p154 = scmp.le.s32.totalorder 1, %s21
      %p155 = scmp.lt.s32.totalorder %s21, 4
      %p156 = pnand %p154, %p155
      %p157 = pneg %p156
      // Predicated region
      $region9: #{tpu_custom_call.1} parent=5 // pred_check
        _
      $region10: #{tpu_custom_call.1} parent=5 // pred_check_branch
        %159 = sbr.rel (%p156) target = $region12
      $region11: #{tpu_custom_call.1} parent=5 // pred_region
        %s160 = ssub.s32 %s21, 1
        // Predicated region
        $region13: #{tpu_custom_call.1} parent=11 // pred_check
          %p161 = pneg %p68
        $region14: #{tpu_custom_call.1} parent=11 // pred_check_branch
          %163 = sbr.rel (%p161) target = $region16
        $region15: #{tpu_custom_call.1} parent=11 // pred_region
          %s165 = ssub.s32 1024, 1024
          %166 = vsyncadd [#allocation6], %s165
          %s167 = sshll.u32 [#allocation5], 4
          %s168 = int_to_ptr.vmem [resolvable:$true] %s167
          %173 = dma.hbm_to_vmem [thread:$0]  %s1, 1024, %s168, [#allocation6], 64, 64, 4
        $region16: #{tpu_custom_call.1} parent=11 // pred_fallthru
          _
      $region12: #{tpu_custom_call.1} parent=5 // pred_fallthru
        _
      %p174 = scmp.lt.s32.totalorder %s21, 3
      // Predicated region
      $region17: #{tpu_custom_call.1} parent=5 // pred_check
        %p175 = pneg %p174
      $region18: #{tpu_custom_call.1} parent=5 // pred_check_branch
        %177 = sbr.rel (%p175) target = $region20
      $region19: #{tpu_custom_call.1} parent=5 // pred_region
        // Predicated region
        $region21: #{tpu_custom_call.1} parent=19 // pred_check
          %p178 = pneg %p41
        $region22: #{tpu_custom_call.1} parent=19 // pred_check_branch
          %180 = sbr.rel (%p178) target = $region24
        $region23: #{tpu_custom_call.1} parent=19 // pred_region
          %s181 = sand.u32 %s31, 1
          %s182 = scalar_lea.sflag [#allocation3], %s181
          %s183 = sand.u32 %s31, 1
          %s184 = smul.addr %s183, 64
          %s185 = scalar_lea.vmem [#allocation2], %s184
          %s186 = smul.u32 16, %s21
          %s188 = ssub.s32 1024, 1024
          %189 = vsyncadd %s182, %s188
          %s190 = smul.addr %s186, 64
          %s191 = scalar_lea.hbm %s0, %s190
          %s192 = sshll.u32 %s185, 4
          %s193 = int_to_ptr.vmem [resolvable:$true] %s192
          %198 = dma.hbm_to_vmem [thread:$0]  %s191, 1024, %s193, %s182, 64, 64, 4
        $region24: #{tpu_custom_call.1} parent=19 // pred_fallthru
          _
      $region20: #{tpu_custom_call.1} parent=5 // pred_fallthru
        _
      %p199 = scmp.le.s32.totalorder 1, %s21
      %p200 = scmp.lt.s32.totalorder %s21, 4
      %p201 = pnand %p199, %p200
      %p202 = pneg %p201
      // Predicated region
      $region25: #{tpu_custom_call.1} parent=5 // pred_check
        _
      $region26: #{tpu_custom_call.1} parent=5 // pred_check_branch
        %204 = sbr.rel (%p201) target = $region28
      $region27: #{tpu_custom_call.1} parent=5 // pred_region
        %s205 = ssub.s32 %s21, 1
        %s206 = sand.u32 %s34, 1
        %s207 = scalar_lea.sflag [#allocation3], %s206
        %s208 = sand.u32 %s34, 1
        %s209 = smul.addr %s208, 64
        %s210 = scalar_lea.vmem [#allocation2], %s209
        // Predicated region
        $region29: #{tpu_custom_call.1} parent=27 // pred_check
          %p211 = pneg %p47
        $region30: #{tpu_custom_call.1} parent=27 // pred_check_branch
          %213 = sbr.rel (%p211) target = $region32
        $region31: #{tpu_custom_call.1} parent=27 // pred_region
          %214 = dma.done %s207, 1024
        $region32: #{tpu_custom_call.1} parent=27 // pred_fallthru
          _
        // Predicated region
        $region33: #{tpu_custom_call.1} parent=27 // pred_check
          %p215 = pneg %p68
        $region34: #{tpu_custom_call.1} parent=27 // pred_check_branch
          %217 = sbr.rel (%p215) target = $region36
        $region35: #{tpu_custom_call.1} parent=27 // pred_region
          %218 = dma.done [#allocation6], 1024
        $region36: #{tpu_custom_call.1} parent=27 // pred_fallthru
          _
        %s219 = sand.u32 %s34, 1
        %s220 = scalar_lea.sflag [#allocation3], %s219
        %s221 = sand.u32 %s34, 1
        %s222 = smul.addr %s221, 64
        %s223 = scalar_lea.vmem [#allocation2], %s222
        %p224 = pneg %p47
        %p225 = pneg %p44
        %p226 = pneg %p68
        %p227 = pneg %p65
        %p228 = pneg %p94
        %p229 = pneg %p91
        %s230 = sand.u32 %s81, 1
        %s231 = scalar_lea.sflag [#allocation4], %s230
        %s232 = sand.u32 %s81, 1
        %s233 = smul.addr %s232, 64
        %s234 = scalar_lea.vmem [#allocation7], %s233
        %p235 = pneg %p120
        %p236 = pneg %p117
        %s237 = sand.u32 %s26, 1
        %s238 = scalar_lea.sflag [#allocation9], %s237
        %s239 = sand.u32 %s107, 1
        %s240 = scalar_lea.vmem [#allocation8], %s239
        %p241 = pneg %p146
        %p242 = pneg %p143
        %s243 = sand.u32 %s26, 1
        %s244 = scalar_lea.sflag [#allocation9], %s243
        %s245 = sand.u32 %s133, 1
        %s246 = scalar_lea.vmem [#allocation10], %s245
        %s247 = smul.u32 16, %s26
        %s248 = smul.u32 16, %s26
        %v250 = vld [vmem:[%s210] sm:$0xf]
        %v251 = vld [vmem:[%s210 + $0x4] sm:$0xf]
        %v252 = vld [vmem:[%s210 + $0x8] sm:$0xf]
        %v253 = vld [vmem:[%s210 + $0xc] sm:$0xf]
        %v254 = vld [vmem:[%s210 + $0x10] sm:$0xf]
        %v255 = vld [vmem:[%s210 + $0x14] sm:$0xf]
        %v256 = vld [vmem:[%s210 + $0x18] sm:$0xf]
        %v257 = vld [vmem:[%s210 + $0x1c] sm:$0xf]
        %v258 = vld [vmem:[%s210 + $0x20] sm:$0xf]
        %v259 = vld [vmem:[%s210 + $0x24] sm:$0xf]
        %v260 = vld [vmem:[%s210 + $0x28] sm:$0xf]
        %v261 = vld [vmem:[%s210 + $0x2c] sm:$0xf]
        %v262 = vld [vmem:[%s210 + $0x30] sm:$0xf]
        %v263 = vld [vmem:[%s210 + $0x34] sm:$0xf]
        %v264 = vld [vmem:[%s210 + $0x38] sm:$0xf]
        %v265 = vld [vmem:[%s210 + $0x3c] sm:$0xf]
        %v266 = vld [vmem:[#allocation5] sm:$0xf]
        %v267 = vld [vmem:[#allocation5 + $0x4] sm:$0xf]
        %v268 = vld [vmem:[#allocation5 + $0x8] sm:$0xf]
        %v269 = vld [vmem:[#allocation5 + $0xc] sm:$0xf]
        %v270 = vld [vmem:[#allocation5 + $0x10] sm:$0xf]
        %v271 = vld [vmem:[#allocation5 + $0x14] sm:$0xf]
        %v272 = vld [vmem:[#allocation5 + $0x18] sm:$0xf]
        %v273 = vld [vmem:[#allocation5 + $0x1c] sm:$0xf]
        %v274 = vld [vmem:[#allocation5 + $0x20] sm:$0xf]
        %v275 = vld [vmem:[#allocation5 + $0x24] sm:$0xf]
        %v276 = vld [vmem:[#allocation5 + $0x28] sm:$0xf]
        %v277 = vld [vmem:[#allocation5 + $0x2c] sm:$0xf]
        %v278 = vld [vmem:[#allocation5 + $0x30] sm:$0xf]
        %v279 = vld [vmem:[#allocation5 + $0x34] sm:$0xf]
        %v280 = vld [vmem:[#allocation5 + $0x38] sm:$0xf]
        %v281 = vld [vmem:[#allocation5 + $0x3c] sm:$0xf]
        %v298 = vunpack.c.l.b16 %v250
        %v299 = vunpack.c.l.b16 %v251
        %v300 = vunpack.c.l.b16 %v252
        %v301 = vunpack.c.l.b16 %v253
        %v302 = vunpack.c.l.b16 %v254
        %v303 = vunpack.c.l.b16 %v255
        %v304 = vunpack.c.l.b16 %v256
        %v305 = vunpack.c.l.b16 %v257
        %v306 = vunpack.c.l.b16 %v258
        %v307 = vunpack.c.l.b16 %v259
        %v308 = vunpack.c.l.b16 %v260
        %v309 = vunpack.c.l.b16 %v261
        %v310 = vunpack.c.l.b16 %v262
        %v311 = vunpack.c.l.b16 %v263
        %v312 = vunpack.c.l.b16 %v264
        %v313 = vunpack.c.l.b16 %v265
        %v314 = vpack.c.b16 %v299, %v298
        %v315 = vpack.c.b16 %v301, %v300
        %v316 = vpack.c.b16 %v303, %v302
        %v317 = vpack.c.b16 %v305, %v304
        %v318 = vpack.c.b16 %v307, %v306
        %v319 = vpack.c.b16 %v309, %v308
        %v320 = vpack.c.b16 %v311, %v310
        %v321 = vpack.c.b16 %v313, %v312
        %v346 = vunpack.c.l.b16 %v266
        %v347 = vunpack.c.l.b16 %v267
        %v348 = vunpack.c.l.b16 %v268
        %v349 = vunpack.c.l.b16 %v269
        %v350 = vunpack.c.l.b16 %v270
        %v351 = vunpack.c.l.b16 %v271
        %v352 = vunpack.c.l.b16 %v272
        %v353 = vunpack.c.l.b16 %v273
        %v354 = vunpack.c.l.b16 %v274
        %v355 = vunpack.c.l.b16 %v275
        %v356 = vunpack.c.l.b16 %v276
        %v357 = vunpack.c.l.b16 %v277
        %v358 = vunpack.c.l.b16 %v278
        %v359 = vunpack.c.l.b16 %v279
        %v360 = vunpack.c.l.b16 %v280
        %v361 = vunpack.c.l.b16 %v281
        %v362 = vpack.c.b16 %v347, %v346
        %v363 = vpack.c.b16 %v349, %v348
        %v364 = vpack.c.b16 %v351, %v350
        %v365 = vpack.c.b16 %v353, %v352
        %v366 = vpack.c.b16 %v355, %v354
        %v367 = vpack.c.b16 %v357, %v356
        %v368 = vpack.c.b16 %v359, %v358
        %v369 = vpack.c.b16 %v361, %v360
        %378 = vmatprep.subr.bf16.mxu0 0
        %379 = vmatpush1.bf16.xpose.msra.mxu0 %v369
        %380 = vmatprep.subr.bf16.mxu0 0
        %381 = vmatpush1.bf16.xpose.msra.mxu0 %v368
        %382 = vmatprep.subr.bf16.mxu0 0
        %383 = vmatpush1.bf16.xpose.msra.mxu0 %v367
        %384 = vmatprep.subr.bf16.mxu0 0
        %385 = vmatpush1.bf16.xpose.msra.mxu0 %v366
        %386 = vmatprep.subr.bf16.mxu0 0
        %387 = vmatpush1.bf16.xpose.msra.mxu0 %v365
        %388 = vmatprep.subr.bf16.mxu0 0
        %389 = vmatpush1.bf16.xpose.msra.mxu0 %v364
        %390 = vmatprep.subr.bf16.mxu0 0
        %391 = vmatpush1.bf16.xpose.msra.mxu0 %v363
        %392 = vmatprep.subr.bf16.mxu0 0
        %393 = vmatpush1.bf16.xpose.msra.mxu0 %v362
        %394 = vmatprep.subr.bf16.mxu0 0
        %395 = vmatpush2.bf16.xpose.msra.mxu0 0
        %396 = vmatprep.subr.bf16.mxu0 0
        %397 = vmatpush2.bf16.xpose.msra.mxu0 0
        %398 = vmatprep.subr.bf16.mxu0 0
        %399 = vmatpush2.bf16.xpose.msra.mxu0 0
        %400 = vmatprep.subr.bf16.mxu0 0
        %401 = vmatpush2.bf16.xpose.msra.mxu0 0
        %402 = vmatprep.subr.bf16.mxu0 0
        %403 = vmatpush2.bf16.xpose.msra.mxu0 0
        %404 = vmatprep.subr.bf16.mxu0 0
        %405 = vmatpush2.bf16.xpose.msra.mxu0 0
        %406 = vmatprep.subr.bf16.mxu0 0
        %407 = vmatpush2.bf16.xpose.msra.mxu0 0
        %408 = vmatprep.subr.bf16.mxu0 0
        %409 = vmatpush2.bf16.xpose.msra.mxu0 0
        %410 = vmatprep.mubr.bf16.mxu0 0
        %411 = vmatmul.mubr.bf16.gmra.mxu0 %v314
        %v412 = vpop.f32.mrf.mxu0
        %v413 = vadd.f32 0.0, %v412
        %v414 = vpop.f32.mrf.mxu0
        %v415 = vpop.f32.mrf.mxu0
        %v416 = vadd.f32 0.0, %v415
        %v417 = vpop.f32.mrf.mxu0
        %418 = vmatprep.mubr.bf16.mxu0 0
        %419 = vmatmul.mubr.bf16.gmra.mxu0 %v315
        %v420 = vpop.f32.mrf.mxu0
        %v421 = vadd.f32 0.0, %v420
        %v422 = vpop.f32.mrf.mxu0
        %v423 = vpop.f32.mrf.mxu0
        %v424 = vadd.f32 0.0, %v423
        %v425 = vpop.f32.mrf.mxu0
        %426 = vmatprep.mubr.bf16.mxu0 0
        %427 = vmatmul.mubr.bf16.gmra.mxu0 %v316
        %v428 = vpop.f32.mrf.mxu0
        %v429 = vadd.f32 0.0, %v428
        %v430 = vpop.f32.mrf.mxu0
        %v431 = vpop.f32.mrf.mxu0
        %v432 = vadd.f32 0.0, %v431
        %v433 = vpop.f32.mrf.mxu0
        %434 = vmatprep.mubr.bf16.mxu0 0
        %435 = vmatmul.mubr.bf16.gmra.mxu0 %v317
        %v436 = vpop.f32.mrf.mxu0
        %v437 = vadd.f32 0.0, %v436
        %v438 = vpop.f32.mrf.mxu0
        %v439 = vpop.f32.mrf.mxu0
        %v440 = vadd.f32 0.0, %v439
        %v441 = vpop.f32.mrf.mxu0
        %442 = vmatprep.mubr.bf16.mxu0 0
        %443 = vmatmul.mubr.bf16.gmra.mxu0 %v318
        %v444 = vpop.f32.mrf.mxu0
        %v445 = vadd.f32 0.0, %v444
        %v446 = vpop.f32.mrf.mxu0
        %v447 = vpop.f32.mrf.mxu0
        %v448 = vadd.f32 0.0, %v447
        %v449 = vpop.f32.mrf.mxu0
        %450 = vmatprep.mubr.bf16.mxu0 0
        %451 = vmatmul.mubr.bf16.gmra.mxu0 %v319
        %v452 = vpop.f32.mrf.mxu0
        %v453 = vadd.f32 0.0, %v452
        %v454 = vpop.f32.mrf.mxu0
        %v455 = vpop.f32.mrf.mxu0
        %v456 = vadd.f32 0.0, %v455
        %v457 = vpop.f32.mrf.mxu0
        %458 = vmatprep.mubr.bf16.mxu0 0
        %459 = vmatmul.mubr.bf16.gmra.mxu0 %v320
        %v460 = vpop.f32.mrf.mxu0
        %v461 = vadd.f32 0.0, %v460
        %v462 = vpop.f32.mrf.mxu0
        %v463 = vpop.f32.mrf.mxu0
        %v464 = vadd.f32 0.0, %v463
        %v465 = vpop.f32.mrf.mxu0
        %466 = vmatprep.mubr.bf16.mxu0 0
        %467 = vmatmul.mubr.bf16.gmra.mxu0 %v321
        %v468 = vpop.f32.mrf.mxu0
        %v469 = vadd.f32 0.0, %v468
        %v470 = vpop.f32.mrf.mxu0
        %v471 = vpop.f32.mrf.mxu0
        %v472 = vadd.f32 0.0, %v471
        %v473 = vpop.f32.mrf.mxu0
        %474 = vdwg.mxu0
        %s475 = smul.u32 %s26, 128
        %v476 = vlaneseq
        %v477 = vshrl.u32 %v476, 7
        %v478 = vadd.s32 %v477, 8
        %v479 = vadd.s32 %v477, 16
        %v480 = vadd.s32 %v477, 24
        %v481 = vadd.s32 %v477, 32
        %v482 = vadd.s32 %v477, 40
        %v483 = vadd.s32 %v477, 48
        %v484 = vadd.s32 %v477, 56
        %v485 = vadd.s32 %v477, 64
        %v486 = vadd.s32 %v477, 72
        %v487 = vadd.s32 %v477, 80
        %v488 = vadd.s32 %v477, 88
        %v489 = vadd.s32 %v477, 96
        %v490 = vadd.s32 %v477, 104
        %v491 = vadd.s32 %v477, 112
        %v492 = vadd.s32 %v477, 120
        %v493 = vstv %s475
        %v494 = vadd.s32 %v493, %v477
        %v495 = vadd.s32 %v493, %v478
        %v496 = vadd.s32 %v493, %v479
        %v497 = vadd.s32 %v493, %v480
        %v498 = vadd.s32 %v493, %v481
        %v499 = vadd.s32 %v493, %v482
        %v500 = vadd.s32 %v493, %v483
        %v501 = vadd.s32 %v493, %v484
        %v502 = vadd.s32 %v493, %v485
        %v503 = vadd.s32 %v493, %v486
        %v504 = vadd.s32 %v493, %v487
        %v505 = vadd.s32 %v493, %v488
        %v506 = vadd.s32 %v493, %v489
        %v507 = vadd.s32 %v493, %v490
        %v508 = vadd.s32 %v493, %v491
        %v509 = vadd.s32 %v493, %v492
        %vm510 = vcmp.lt.s32.totalorder %v494, 300
        %vm511 = vcmp.lt.s32.totalorder %v495, 300
        %vm512 = vcmp.lt.s32.totalorder %v496, 300
        %vm513 = vcmp.lt.s32.totalorder %v497, 300
        %vm514 = vcmp.lt.s32.totalorder %v498, 300
        %vm515 = vcmp.lt.s32.totalorder %v499, 300
        %vm516 = vcmp.lt.s32.totalorder %v500, 300
        %vm517 = vcmp.lt.s32.totalorder %v501, 300
        %vm518 = vcmp.lt.s32.totalorder %v502, 300
        %vm519 = vcmp.lt.s32.totalorder %v503, 300
        %vm520 = vcmp.lt.s32.totalorder %v504, 300
        %vm521 = vcmp.lt.s32.totalorder %v505, 300
        %vm522 = vcmp.lt.s32.totalorder %v506, 300
        %vm523 = vcmp.lt.s32.totalorder %v507, 300
        %vm524 = vcmp.lt.s32.totalorder %v508, 300
        %vm525 = vcmp.lt.s32.totalorder %v509, 300
        %v526 = vsel %vm510, %v413, -inf
        %v527 = vsel %vm511, %v416, -inf
        %v528 = vsel %vm512, %v421, -inf
        %v529 = vsel %vm513, %v424, -inf
        %v530 = vsel %vm514, %v429, -inf
        %v531 = vsel %vm515, %v432, -inf
        %v532 = vsel %vm516, %v437, -inf
        %v533 = vsel %vm517, %v440, -inf
        %v534 = vsel %vm518, %v445, -inf
        %v535 = vsel %vm519, %v448, -inf
        %v536 = vsel %vm520, %v453, -inf
        %v537 = vsel %vm521, %v456, -inf
        %v538 = vsel %vm522, %v461, -inf
        %v539 = vsel %vm523, %v464, -inf
        %v540 = vsel %vm524, %v469, -inf
        %v541 = vsel %vm525, %v472, -inf
        %v542 = vmax.f32 %v526, %v530
        %v543 = vmax.f32 %v527, %v531
        %v544 = vmax.f32 %v528, %v532
        %v545 = vmax.f32 %v529, %v533
        %v546 = vmax.f32 %v542, %v534
        %v547 = vmax.f32 %v543, %v535
        %v548 = vmax.f32 %v544, %v536
        %v549 = vmax.f32 %v545, %v537
        %v550 = vmax.f32 %v546, %v538
        %v551 = vmax.f32 %v547, %v539
        %v552 = vmax.f32 %v548, %v540
        %v553 = vmax.f32 %v549, %v541
        %v554 = vmax.f32 %v550, %v551
        %v555 = vmax.f32 %v552, %v553
        %v556 = vmax.f32 %v554, %v555
        %v557 = vrot.slane %v556, 4
        %v558 = vmax.f32 %v556, %v557
        %v559 = vrot.slane %v558, 2
        %v560 = vmax.f32 %v558, %v559
        %v561 = vrot.slane %v560, 1
        %v562 = vmax.f32 %v560, %v561
        %v563 = vsub.f32 %v526, %v562
        %v564 = vsub.f32 %v527, %v562
        %v565 = vsub.f32 %v528, %v562
        %v566 = vsub.f32 %v529, %v562
        %v567 = vsub.f32 %v530, %v562
        %v568 = vsub.f32 %v531, %v562
        %v569 = vsub.f32 %v532, %v562
        %v570 = vsub.f32 %v533, %v562
        %v571 = vsub.f32 %v534, %v562
        %v572 = vsub.f32 %v535, %v562
        %v573 = vsub.f32 %v536, %v562
        %v574 = vsub.f32 %v537, %v562
        %v575 = vsub.f32 %v538, %v562
        %v576 = vsub.f32 %v539, %v562
        %v577 = vsub.f32 %v540, %v562
        %v578 = vsub.f32 %v541, %v562
        %v579 = vmul.f32 %v563, 1.442695
        %v580 = vpow.pop %v579
        %v581 = vmul.f32 %v564, 1.442695
        %v582 = vpow.pop %v581
        %v583 = vmul.f32 %v565, 1.442695
        %v584 = vpow.pop %v583
        %v585 = vmul.f32 %v566, 1.442695
        %v586 = vpow.pop %v585
        %v587 = vmul.f32 %v567, 1.442695
        %v588 = vpow.pop %v587
        %v589 = vmul.f32 %v568, 1.442695
        %v590 = vpow.pop %v589
        %v591 = vmul.f32 %v569, 1.442695
        %v592 = vpow.pop %v591
        %v593 = vmul.f32 %v570, 1.442695
        %v594 = vpow.pop %v593
        %v595 = vmul.f32 %v571, 1.442695
        %v596 = vpow.pop %v595
        %v597 = vmul.f32 %v572, 1.442695
        %v598 = vpow.pop %v597
        %v599 = vmul.f32 %v573, 1.442695
        %v600 = vpow.pop %v599
        %v601 = vmul.f32 %v574, 1.442695
        %v602 = vpow.pop %v601
        %v603 = vmul.f32 %v575, 1.442695
        %v604 = vpow.pop %v603
        %v605 = vmul.f32 %v576, 1.442695
        %v606 = vpow.pop %v605
        %v607 = vmul.f32 %v577, 1.442695
        %v608 = vpow.pop %v607
        %v609 = vmul.f32 %v578, 1.442695
        %v610 = vpow.pop %v609
        %v611 = vpack.c.bf16 %v582, %v580
        %v612 = vpack.c.bf16 %v586, %v584
        %v613 = vpack.c.bf16 %v590, %v588
        %v614 = vpack.c.bf16 %v594, %v592
        %v615 = vpack.c.bf16 %v598, %v596
        %v616 = vpack.c.bf16 %v602, %v600
        %v617 = vpack.c.bf16 %v606, %v604
        %v618 = vpack.c.bf16 %v610, %v608
        %v627 = vunpack.c.l.b16 %v611
        %v628 = vunpack.c.h.b16 %v611
        %v629 = vunpack.c.l.b16 %v612
        %v630 = vunpack.c.h.b16 %v612
        %v631 = vunpack.c.l.b16 %v613
        %v632 = vunpack.c.h.b16 %v613
        %v633 = vunpack.c.l.b16 %v614
        %v634 = vunpack.c.h.b16 %v614
        %v635 = vunpack.c.l.b16 %v615
        %v636 = vunpack.c.h.b16 %v615
        %v637 = vunpack.c.l.b16 %v616
        %v638 = vunpack.c.h.b16 %v616
        %v639 = vunpack.c.l.b16 %v617
        %v640 = vunpack.c.h.b16 %v617
        %v641 = vunpack.c.l.b16 %v618
        %v642 = vunpack.c.h.b16 %v618
        %v643 = vpack.c.b16 %v627, %v627
        %v644 = vpack.c.b16 %v628, %v628
        %v645 = vpack.c.b16 %v629, %v629
        %v646 = vpack.c.b16 %v630, %v630
        %v647 = vpack.c.b16 %v631, %v631
        %v648 = vpack.c.b16 %v632, %v632
        %v649 = vpack.c.b16 %v633, %v633
        %v650 = vpack.c.b16 %v634, %v634
        %v651 = vpack.c.b16 %v635, %v635
        %v652 = vpack.c.b16 %v636, %v636
        %v653 = vpack.c.b16 %v637, %v637
        %v654 = vpack.c.b16 %v638, %v638
        %v655 = vpack.c.b16 %v639, %v639
        %v656 = vpack.c.b16 %v640, %v640
        %v657 = vpack.c.b16 %v641, %v641
        %v658 = vpack.c.b16 %v642, %v642
        %675 = vst [vmem:[%s234] sm:$0xf] %v643
        %676 = vst [vmem:[%s234 + $0x4] sm:$0xf] %v644
        %677 = vst [vmem:[%s234 + $0x8] sm:$0xf] %v645
        %678 = vst [vmem:[%s234 + $0xc] sm:$0xf] %v646
        %679 = vst [vmem:[%s234 + $0x10] sm:$0xf] %v647
        %680 = vst [vmem:[%s234 + $0x14] sm:$0xf] %v648
        %681 = vst [vmem:[%s234 + $0x18] sm:$0xf] %v649
        %682 = vst [vmem:[%s234 + $0x1c] sm:$0xf] %v650
        %683 = vst [vmem:[%s234 + $0x20] sm:$0xf] %v651
        %684 = vst [vmem:[%s234 + $0x24] sm:$0xf] %v652
        %685 = vst [vmem:[%s234 + $0x28] sm:$0xf] %v653
        %686 = vst [vmem:[%s234 + $0x2c] sm:$0xf] %v654
        %687 = vst [vmem:[%s234 + $0x30] sm:$0xf] %v655
        %688 = vst [vmem:[%s234 + $0x34] sm:$0xf] %v656
        %689 = vst [vmem:[%s234 + $0x38] sm:$0xf] %v657
        %690 = vst [vmem:[%s234 + $0x3c] sm:$0xf] %v658
        %691 = vst [vmem:[%s240] sm:$0x1] %v562
        %v692 = vadd.f32 %v580, %v582
        %v693 = vadd.f32 %v692, %v584
        %v694 = vadd.f32 %v693, %v586
        %v695 = vadd.f32 %v694, %v588
        %v696 = vadd.f32 %v695, %v590
        %v697 = vadd.f32 %v696, %v592
        %v698 = vadd.f32 %v697, %v594
        %v699 = vadd.f32 %v698, %v596
        %v700 = vadd.f32 %v699, %v598
        %v701 = vadd.f32 %v700, %v600
        %v702 = vadd.f32 %v701, %v602
        %v703 = vadd.f32 %v702, %v604
        %v704 = vadd.f32 %v703, %v606
        %v705 = vadd.f32 %v704, %v608
        %v706 = vadd.f32 %v705, %v610
        %v707 = vrot.slane %v706, 4
        %v708 = vadd.f32 %v706, %v707
        %v709 = vrot.slane %v708, 2
        %v710 = vadd.f32 %v708, %v709
        %v711 = vrot.slane %v710, 1
        %v712 = vadd.f32 %v710, %v711
        %713 = vst [vmem:[%s246] sm:$0x1] %v712
        %s714 = sand.u32 %s81, 1
        %s715 = scalar_lea.sflag [#allocation4], %s714
        %s716 = sand.u32 %s81, 1
        %s717 = smul.addr %s716, 64
        %s718 = scalar_lea.vmem [#allocation7], %s717
        %s719 = sand.u32 %s26, 1
        %s720 = scalar_lea.sflag [#allocation9], %s719
        %s721 = sand.u32 %s107, 1
        %s722 = scalar_lea.vmem [#allocation8], %s721
        %s723 = sand.u32 %s26, 1
        %s724 = scalar_lea.sflag [#allocation9], %s723
        %s725 = sand.u32 %s133, 1
        %s726 = scalar_lea.vmem [#allocation10], %s725
        // Predicated region
        $region37: #{tpu_custom_call.1} parent=27 // pred_check
          %p727 = pneg %p91
        $region38: #{tpu_custom_call.1} parent=27 // pred_check_branch
          %729 = sbr.rel (%p727) target = $region40
        $region39: #{tpu_custom_call.1} parent=27 // pred_region
          %s730 = smul.u32 16, %s26
          %s732 = ssub.s32 1024, 1024
          %733 = vsyncadd %s715, %s732
          %s734 = smul.addr %s730, 64
          %s735 = scalar_lea.hbm %s2, %s734
          %s736 = sshll.u32 %s718, 4
          %s737 = int_to_ptr.vmem [resolvable:$true] %s736
          %742 = dma.vmem_to_hbm [thread:$0]  %s737, 1024, %s735, %s715, 64, 64, 4
        $region40: #{tpu_custom_call.1} parent=27 // pred_fallthru
          _
        // Predicated region
        $region41: #{tpu_custom_call.1} parent=27 // pred_check
          %p743 = pneg %p117
        $region42: #{tpu_custom_call.1} parent=27 // pred_check_branch
          %745 = sbr.rel (%p743) target = $region44
        $region43: #{tpu_custom_call.1} parent=27 // pred_region
          %s747 = ssub.s32 16, 16
          %748 = vsyncadd %s720, %s747
          %s749 = smul.addr %s26, 16
          %s750 = scalar_lea.hbm %s3, %s749
          %s752 = sshll.u32 %s722, 4
          %s753 = int_to_ptr.vmem [resolvable:$true] %s752
          %755 = dma.vmem_to_hbm [thread:$0]  %s753, 16, %s750, %s720
        $region44: #{tpu_custom_call.1} parent=27 // pred_fallthru
          _
        // Predicated region
        $region45: #{tpu_custom_call.1} parent=27 // pred_check
          %p756 = pneg %p143
        $region46: #{tpu_custom_call.1} parent=27 // pred_check_branch
          %758 = sbr.rel (%p756) target = $region48
        $region47: #{tpu_custom_call.1} parent=27 // pred_region
          %s760 = ssub.s32 16, 16
          %761 = vsyncadd %s724, %s760
          %s762 = smul.addr %s26, 16
          %s763 = scalar_lea.hbm %s4, %s762
          %s765 = sshll.u32 %s726, 4
          %s766 = int_to_ptr.vmem [resolvable:$true] %s765
          %768 = dma.vmem_to_hbm [thread:$0]  %s766, 16, %s763, %s724
        $region48: #{tpu_custom_call.1} parent=27 // pred_fallthru
          _
      $region28: #{tpu_custom_call.1} parent=5 // pred_fallthru
        _
      %p769 = scmp.le.s32.totalorder 2, %s21
      // Predicated region
      $region49: #{tpu_custom_call.1} parent=5 // pred_check
        %p770 = pneg %p769
      $region50: #{tpu_custom_call.1} parent=5 // pred_check_branch
        %772 = sbr.rel (%p770) target = $region52
      $region51: #{tpu_custom_call.1} parent=5 // pred_region
        %s773 = ssub.s32 %s21, 2
        // Predicated region
        $region53: #{tpu_custom_call.1} parent=51 // pred_check
          %p774 = pneg %p97
        $region54: #{tpu_custom_call.1} parent=51 // pred_check_branch
          %776 = sbr.rel (%p774) target = $region56
        $region55: #{tpu_custom_call.1} parent=51 // pred_region
          %s777 = sand.u32 %s82, 1
          %s778 = scalar_lea.sflag [#allocation4], %s777
          %s779 = sand.u32 %s82, 1
          %s780 = smul.addr %s779, 64
          %s781 = scalar_lea.vmem [#allocation7], %s780
          %782 = dma.done %s778, 1024
        $region56: #{tpu_custom_call.1} parent=51 // pred_fallthru
          _
        // Predicated region
        $region57: #{tpu_custom_call.1} parent=51 // pred_check
          %p783 = pneg %p123
        $region58: #{tpu_custom_call.1} parent=51 // pred_check_branch
          %785 = sbr.rel (%p783) target = $region60
        $region59: #{tpu_custom_call.1} parent=51 // pred_region
          %s786 = sand.u32 %s27, 1
          %s787 = scalar_lea.sflag [#allocation9], %s786
          %s788 = sand.u32 %s108, 1
          %s789 = scalar_lea.vmem [#allocation8], %s788
          %790 = dma.done %s787, 16
        $region60: #{tpu_custom_call.1} parent=51 // pred_fallthru
          _
        // Predicated region
        $region61: #{tpu_custom_call.1} parent=51 // pred_check
          %p791 = pneg %p149
        $region62: #{tpu_custom_call.1} parent=51 // pred_check_branch
          %793 = sbr.rel (%p791) target = $region64
        $region63: #{tpu_custom_call.1} parent=51 // pred_region
          %s794 = sand.u32 %s27, 1
          %s795 = scalar_lea.sflag [#allocation9], %s794
          %s796 = sand.u32 %s134, 1
          %s797 = scalar_lea.vmem [#allocation10], %s796
          %798 = dma.done %s795, 16
        $region64: #{tpu_custom_call.1} parent=51 // pred_fallthru
          _
      $region52: #{tpu_custom_call.1} parent=5 // pred_fallthru
        _
    $region6: #{tpu_custom_call.1} parent=1 // loop_footer
      %s25 = sadd.s32 1, %s21
    $region7: #{tpu_custom_call.1} parent=1 // loop_footer_branch
      %20 = sbr.rel target = $region3
    $region8: #{tpu_custom_call.1} parent=1 // loop_exit
      _
    %799 = vsyncpa [#allocation3], 1
    %s800 = scalar_lea.sflag [#allocation3], 1
    %801 = vsyncpa %s800, 1
    %802 = vsyncpa [#allocation6], 1
    %803 = vsyncpa [#allocation4], 1
    %s804 = scalar_lea.sflag [#allocation4], 1
    %805 = vsyncpa %s804, 1
    %806 = vsyncpa [#allocation9], 1
    %s807 = scalar_lea.sflag [#allocation9], 1
    %808 = vsyncpa %s807, 1

</llo_original>
